<compile_context>
chip_gen: v6e
topology: v6e:2x2x1
jax: 0.10.0
libtpu: 0.0.40
codegen_flags: <defaults>
</compile_context>

<pallas_src>
import jax
import jax.numpy as jnp
from jax import lax
from jax.experimental import pallas as pl
from jax.experimental.pallas import tpu as pltpu


def _round_up(x: int, m: int) -> int:
    return (x + m - 1) // m * m


def _choose_block_b(batch: int, dim: int, itemsize: int) -> int:
    """Pick the batch tile so the double-buffered working set fits VMEM everywhere.

    2 inputs x 2 pipeline buffers x (block_b * dim * itemsize) is kept <= ~8 MiB:
    under the 16 MiB scoped default on v5e and well under v7x's 64 MiB physical
    VMEM, while large enough (128..2048 rows) to amortize the ~0.35 us/grid-step
    overhead.
    """
    budget = 8 * 1024 * 1024
    cap = max(128, (budget // (4 * dim * itemsize)) // 128 * 128)
    blk = min(2048, cap, _round_up(batch, 128))
    if batch >= 256:
        # Keep at least 2 grid steps so ("parallel",) can split the stream across
        # both TensorCores on v7x.
        blk = min(blk, _round_up(pl.cdiv(batch, 2), 128))
    # If one block covers the whole batch, use the exact batch size (block shape
    # equal to the full array dim is always legal).
    return batch if blk >= batch else blk


def _scores_from_tiles(t, c):
    """sigmoid(sum_d t*c) for a (block_b, D) tile pair, as a lane-dense (1, block_b) row.

    The reduction over D runs on the MXU as ones(1,D) @ prod(block_b,D)^T, which
    produces the result already laid out along lanes (B on the lane axis)."""
    t = t.astype(jnp.float32)   # f32 accumulate; also portable to v5e (no bf16 VPU)
    c = c.astype(jnp.float32)
    prod = t * c                                           # (block_b, D)
    ones = jnp.ones((1, prod.shape[1]), jnp.float32)       # (1, D)
    s = lax.dot_general(ones, prod, (((1,), (1,)), ((), ())),
                        preferred_element_type=jnp.float32)  # (1, block_b)
    # sigmoid(s) = 1 / (1 + exp(-s)); approximate reciprocal runs on the EUP slot.
    return pl.reciprocal(1.0 + jnp.exp(-s), approx=True)


# ----------------------------------------------------------------------------
# 1) module.forward: pre-gathered embeddings -> scores
# ----------------------------------------------------------------------------
def _w2v_forward_kernel(t_ref, c_ref, o_ref):
    # t_ref, c_ref: (block_b, D) VMEM tiles; o_ref: (1, block_b) lane-dense scores.
    o_ref[...] = _scores_from_tiles(t_ref[...], c_ref[...])


def word2vec_forward(target_embeds, context_embeds, *, block_b=None):
    """P(c|t) = sigmoid(c . t) per row.

    target_embeds / context_embeds: (B, D), f32 or bf16 (bf16 halves HBM traffic;
    accumulation is f32 either way).  Returns f32 scores of shape (B,).
    """
    assert target_embeds.shape == context_embeds.shape
    B, D = target_embeds.shape
    if block_b is None:
        block_b = _choose_block_b(B, D, jnp.dtype(target_embeds.dtype).itemsize)

    grid = (pl.cdiv(B, block_b),)
    out = pl.pallas_call(
        _w2v_forward_kernel,
        out_shape=jax.ShapeDtypeStruct((1, B), jnp.float32),
        grid_spec=pltpu.PrefetchScalarGridSpec(
            num_scalar_prefetch=0,
            grid=grid,
            in_specs=[
                pl.BlockSpec((block_b, D), lambda i: (i, 0)),
                pl.BlockSpec((block_b, D), lambda i: (i, 0)),
            ],
            out_specs=pl.BlockSpec((1, block_b), lambda i: (0, i)),
        ),
        compiler_params=pltpu.CompilerParams(
            dimension_semantics=("parallel",),
            vmem_limit_bytes=32 * 1024 * 1024),
    )(target_embeds, context_embeds)
    return out[0]


# ----------------------------------------------------------------------------
# 2) fused gather + forward: (tables, ids) -> scores
# ----------------------------------------------------------------------------
def _make_fused_scores_kernel(block_b: int, n_ids: int):
    def kernel(tids_ref, cids_ref, ttab_ref, ctab_ref, o_ref, tbuf, cbuf, sem):
        base = pl.program_id(0) * block_b

        # Gather 2*block_b embedding rows HBM -> VMEM with async row DMAs:
        # start them all, then wait, so the row copies overlap each other.
        @pl.loop(0, block_b)
        def _start(r):
            off = jnp.minimum(base + r, n_ids - 1)   # clamp the ragged tail block
            pltpu.make_async_copy(
                ttab_ref.at[tids_ref[off]], tbuf.at[r], sem.at[0]).start()
            pltpu.make_async_copy(
                ctab_ref.at[cids_ref[off]], cbuf.at[r], sem.at[1]).start()

        @pl.loop(0, block_b)
        def _wait(r):
            # Every row copy has the same byte count, so waiting block_b times on
            # each semaphore drains exactly the completions posted above.
            pltpu.make_async_copy(ttab_ref.at[0], tbuf.at[0], sem.at[0]).wait()
            pltpu.make_async_copy(ctab_ref.at[0], cbuf.at[0], sem.at[1]).wait()

        o_ref[...] = _scores_from_tiles(tbuf[...], cbuf[...])

    return kernel


def word2vec_scores(target_table, context_table, target_ids, context_ids, *, block_b=None):
    """Fused scoring: gathers embedding rows for (target_id, context_id) pairs inside
    the kernel (ids scalar-prefetched into SMEM, tables stay in HBM, rows fetched with
    per-row async DMAs) and returns sigmoid(t . c) per pair — the module's eval path
    (pass target_table twice) or train path (pass context_table), without materializing
    the two gathered (B, D) arrays in HBM.

    NOTE: ids live in SMEM, so B per call should stay modest (<= a few 10k); shard
    larger batches over multiple calls.
    """
    V, D = target_table.shape
    assert context_table.shape == (V, D)
    assert target_ids.shape == context_ids.shape
    B = target_ids.shape[0]
    if block_b is None:
        block_b = _choose_block_b(B, D, jnp.dtype(target_table.dtype).itemsize)

    grid = (pl.cdiv(B, block_b),)
    kernel = _make_fused_scores_kernel(block_b, B)
    out = pl.pallas_call(
        kernel,
        out_shape=jax.ShapeDtypeStruct((1, B), jnp.float32),
        grid_spec=pltpu.PrefetchScalarGridSpec(
            num_scalar_prefetch=2,                   # target_ids, context_ids -> SMEM
            grid=grid,
            in_specs=[
                pl.BlockSpec(memory_space=pl.ANY),   # target table stays in HBM
                pl.BlockSpec(memory_space=pl.ANY),   # context table stays in HBM
            ],
            out_specs=pl.BlockSpec((1, block_b), lambda i, tids, cids: (0, i)),
            scratch_shapes=[
                pltpu.VMEM((block_b, D), target_table.dtype),
                pltpu.VMEM((block_b, D), context_table.dtype),
                pltpu.SemaphoreType.DMA((2,)),
            ],
        ),
        compiler_params=pltpu.CompilerParams(
            dimension_semantics=("parallel",),
            vmem_limit_bytes=32 * 1024 * 1024),
    )(target_ids.astype(jnp.int32), context_ids.astype(jnp.int32),
      target_table, context_table)
    return out[0]


if __name__ == "__main__":
    key = jax.random.PRNGKey(0)

    vocab_size = 50
    embedding_dim = 32
    batch_size = 8

    k_tgt, k_ids_t, k_ids_c = jax.random.split(key, 3)

    # The module initializes target_embeddings ~ U(-0.5/dim, 0.5/dim) and
    # context_embeddings = 0; with that fresh init every score is ~0.5, which would
    # make a numeric check vacuous.  The demo therefore uses trained-like unit-scale
    # embeddings — the forward math is identical at any scale.
    target_table_f32 = jax.random.uniform(
        k_tgt, (vocab_size, embedding_dim), jnp.float32, minval=-1.0, maxval=1.0)
    # Storage / streaming dtype for the embeddings: bf16 (kernel accumulates in f32).
    target_table_bf16 = target_table_f32.astype(jnp.bfloat16)

    target_ids = jax.random.randint(k_ids_t, (batch_size,), 0, vocab_size)
    context_ids = jax.random.randint(k_ids_c, (batch_size,), 0, vocab_size)

    # Eval path of the module (train=False): both lookups come from target_embeddings.
    t_emb = target_table_bf16[target_ids]
    c_emb = target_table_bf16[context_ids]

    # 1) module.forward on pre-gathered embeddings (bf16 streamed, f32 accumulated).
    scores = jax.block_until_ready(word2vec_forward(t_emb, c_emb))

    # 2) fused gather + forward (f32 table: each gathered row is one word-aligned DMA).
    scores_fused = jax.block_until_ready(
        word2vec_scores(target_table_f32, target_table_f32, target_ids, context_ids))

    # Pure-JAX references (f32 math).  Tolerances cover bf16 inputs and the
    # approximate EUP reciprocal; scores are spread across (0, 1), so these checks
    # remain meaningful.
    ref_bf16_inputs = jax.nn.sigmoid(
        jnp.sum(t_emb.astype(jnp.float32) * c_emb.astype(jnp.float32), axis=1))
    ref_f32_inputs = jax.nn.sigmoid(
        jnp.sum(target_table_f32[target_ids] * target_table_f32[context_ids], axis=1))

    assert scores.shape == (batch_size,)
    assert scores_fused.shape == (batch_size,)
    assert jnp.allclose(scores, ref_bf16_inputs, atol=2e-2, rtol=2e-2)
    assert jnp.allclose(scores_fused, ref_f32_inputs, atol=2e-2, rtol=2e-2)

    print("KERNEL_OK")
</pallas_src>

<mosaic_0001>
module attributes {stable_mosaic.version = 11 : i64} {
  func.func @_w2v_forward_kernel(%arg0: i32, %arg1: memref<8x32xbf16, #tpu.memory_space<vmem>>, %arg2: memref<8x32xbf16, #tpu.memory_space<vmem>>, %arg3: memref<1x8xf32, #tpu.memory_space<vmem>>) attributes {dimension_semantics = [#tpu.dimension_semantics<parallel>], iteration_bounds = array<i64: 1>, scalar_prefetch = 0 : i64, scratch_operands = 0 : i64, tpu.core_type = #tpu.core_type<tc>, window_params = [{transform_indices = @transform_0, window_bounds = array<i64: 8, 32>}, {transform_indices = @transform_1, window_bounds = array<i64: 8, 32>}, {transform_indices = @transform_2, window_bounds = array<i64: 1, 8>}]} {
    %c0 = arith.constant 0 : index
    %c0_0 = arith.constant 0 : index
    %0 = vector.load %arg1[%c0, %c0_0] : memref<8x32xbf16, #tpu.memory_space<vmem>>, vector<8x32xbf16>
    %c0_1 = arith.constant 0 : index
    %c0_2 = arith.constant 0 : index
    %1 = vector.load %arg2[%c0_1, %c0_2] : memref<8x32xbf16, #tpu.memory_space<vmem>>, vector<8x32xbf16>
    %2 = arith.extf %0 : vector<8x32xbf16> to vector<8x32xf32>
    %3 = arith.extf %1 : vector<8x32xbf16> to vector<8x32xf32>
    %4 = arith.mulf %2, %3 : vector<8x32xf32>
    %cst = arith.constant 1.000000e+00 : f32
    %5 = vector.broadcast %cst : f32 to vector<1x32xf32>
    %cst_3 = arith.constant dense<0.000000e+00> : vector<1x8xf32>
    %6 = tpu.matmul %5, %4, %cst_3 {dimension_numbers = #tpu.dot_dimension_numbers<[1], [1], [0], [0], [0, 0, 1, 0], [], []>} : vector<1x32xf32>, vector<8x32xf32>, vector<1x8xf32> -> vector<1x8xf32>
    %cst_4 = arith.constant 0.000000e+00 : f32
    %7 = vector.broadcast %cst_4 : f32 to vector<1x8xf32>
    %8 = arith.subf %7, %6 : vector<1x8xf32>
    %9 = math.exp %8 : vector<1x8xf32>
    %cst_5 = arith.constant 1.000000e+00 : f32
    %10 = vector.broadcast %cst_5 : f32 to vector<1x8xf32>
    %11 = arith.addf %10, %9 : vector<1x8xf32>
    %12 = tpu.reciprocal %11 {approx = true} : vector<1x8xf32> -> vector<1x8xf32>
    %c0_6 = arith.constant 0 : index
    %c0_7 = arith.constant 0 : index
    %13 = vector.load %arg3[%c0_6, %c0_7] : memref<1x8xf32, #tpu.memory_space<vmem>>, vector<1x8xf32>
    tpu.vector_store %arg3[%c0_6, %c0_7], %12 {strides = array<i32>} : memref<1x8xf32, #tpu.memory_space<vmem>>, vector<1x8xf32>,
    return
  }
  func.func @transform_0(%arg0: i32) -> (i32, i32) {
    %c0_i32 = arith.constant 0 : i32
    %c0_i32_0 = arith.constant 0 : i32
    return %arg0, %c0_i32 : i32, i32
  }
  func.func @transform_1(%arg0: i32) -> (i32, i32) {
    %c0_i32 = arith.constant 0 : i32
    %c0_i32_0 = arith.constant 0 : i32
    return %arg0, %c0_i32 : i32, i32
  }
  func.func @transform_2(%arg0: i32) -> (i32, i32) {
    %c0_i32 = arith.constant 0 : i32
    %c0_i32_0 = arith.constant 0 : i32
    return %c0_i32, %arg0 : i32, i32
  }
}

</mosaic_0001>

<llo_original>
// kernel: tpu_custom_call.1
$region0: #{tpu_custom_call.1}
  #allocation0 [shape = 'u32[]', space=smem, size = 0x4, offset = 0x4, fixed_abs, tag = 'smem constant byte address 0x4 - core index']
  #allocation1 [shape = 'u32[144,128]{1,0:T(1,128)}', space=vmem, size = 0x12000, scoped, tag = 'internal scratch']
  %s0 = inlined_call_operand.hbm [shape: bf16[8,32], index: 0, kind: input, shape index: {}]
  %s1 = inlined_call_operand.hbm [shape: bf16[8,32], index: 1, kind: input, shape index: {}]
  %s2 = inlined_call_operand.hbm [shape: f32[1,8], index: 2, kind: output, shape index: {}]
  %s3 = sld [smem:[#allocation0]]
  $region26: #{tpu_custom_call.1} parent=0
    _
  %s5 = ssub.s32 1, %s3
  %s6 = scalar_select 0, %s5, %s3
  $region1: #{tpu_custom_call.1} parent=0
    #allocation2 [shape = 'u8[2048]{0}', space=vmem, size = 0x800, scoped, tag = 'input window, operand 0, single buffered']
    #allocation3 [shape = 's32[1]{0}', space=sflag, size = 0x4, scoped, tag = 'scoped memory for tpu_custom_call.1']
    #allocation4 [shape = 's32[1]{0}', space=sflag, size = 0x4, scoped, tag = 'scoped memory for tpu_custom_call.1']
    #allocation5 [shape = 'u8[2048]{0}', space=vmem, size = 0x800, scoped, tag = 'input window, operand 1, single buffered']
    #allocation6 [shape = 's32[1]{0}', space=sflag, size = 0x4, scoped, tag = 'scoped memory for tpu_custom_call.1']
    #allocation7 [shape = 'u8[512]{0}', space=vmem, size = 0x400, scoped, tag = 'output window, operand 0, single buffered']
    %7 = vsyncpa [#allocation3], 0
    %8 = vsyncpa [#allocation6], 0
    %9 = vsyncpa [#allocation4], 0
    // Predicated region
    $region2: #{tpu_custom_call.1} parent=1 // pred_check
      _
    $region3: #{tpu_custom_call.1} parent=1 // pred_check_branch
      %11 = sbr.rel (0) target = $region5
    $region4: #{tpu_custom_call.1} parent=1 // pred_region
      %s13 = ssub.s32 64, 64
      %14 = vsyncadd [#allocation3], %s13
      %s16 = sshll.u32 [#allocation2], 4
      %s17 = int_to_ptr.vmem [resolvable:$true] %s16
      %19 = dma.hbm_to_vmem [thread:$0]  %s0, 64, %s17, [#allocation3]
    $region5: #{tpu_custom_call.1} parent=1 // pred_fallthru
      _
    // Predicated region
    $region6: #{tpu_custom_call.1} parent=1 // pred_check
      _
    $region7: #{tpu_custom_call.1} parent=1 // pred_check_branch
      %21 = sbr.rel (0) target = $region9
    $region8: #{tpu_custom_call.1} parent=1 // pred_region
      %s23 = ssub.s32 64, 64
      %24 = vsyncadd [#allocation6], %s23
      %s26 = sshll.u32 [#allocation5], 4
      %s27 = int_to_ptr.vmem [resolvable:$true] %s26
      %29 = dma.hbm_to_vmem [thread:$0]  %s1, 64, %s27, [#allocation6]
    $region9: #{tpu_custom_call.1} parent=1 // pred_fallthru
      _
    // Predicated region
    $region10: #{tpu_custom_call.1} parent=1 // pred_check
      _
    $region11: #{tpu_custom_call.1} parent=1 // pred_check_branch
      %31 = sbr.rel (0) target = $region13
    $region12: #{tpu_custom_call.1} parent=1 // pred_region
      %32 = dma.done [#allocation3], 64
    $region13: #{tpu_custom_call.1} parent=1 // pred_fallthru
      _
    // Predicated region
    $region14: #{tpu_custom_call.1} parent=1 // pred_check
      _
    $region15: #{tpu_custom_call.1} parent=1 // pred_check_branch
      %34 = sbr.rel (0) target = $region17
    $region16: #{tpu_custom_call.1} parent=1 // pred_region
      %35 = dma.done [#allocation6], 64
    $region17: #{tpu_custom_call.1} parent=1 // pred_fallthru
      _
    %v36 = vld [vmem:[#allocation2] sm:$0xf]
    %v37 = vld [vmem:[#allocation5] sm:$0xf]
    %v38 = vunpack.c.l.bf16 %v36
    %v39 = vunpack.c.l.bf16 %v37
    %v40 = vmul.f32 %v38, %v39
    %vm41 = vcmask 261120
    %v43 = vsel %vm41, 1.0, 0
    %v46 = vsel %vm41, %v40, 0
    %48 = vmatprep.subr.mxu0 0.0
    %49 = vmatpush1.xpose.msra.mxu0 0.0
    %50 = vmatprep.subr.mxu0 0.0
    %51 = vmatpush1.xpose.msra.mxu0 0.0
    %52 = vmatprep.subr.mxu0 0.0
    %53 = vmatpush1.xpose.msra.mxu0 0.0
    %54 = vmatprep.subr.mxu0 0.0
    %55 = vmatpush1.xpose.msra.mxu0 0.0
    %56 = vmatprep.subr.mxu0 0.0
    %57 = vmatpush1.xpose.msra.mxu0 0.0
    %58 = vmatprep.subr.mxu0 0.0
    %59 = vmatpush1.xpose.msra.mxu0 0.0
    %60 = vmatprep.subr.mxu0 0.0
    %61 = vmatpush1.xpose.msra.mxu0 0.0
    %62 = vmatprep.subr.mxu0 0.0
    %63 = vmatpush1.xpose.msra.mxu0 0.0
    %64 = vmatprep.subr.mxu0 0.0
    %65 = vmatpush1.xpose.msra.mxu0 0.0
    %66 = vmatprep.subr.mxu0 0.0
    %67 = vmatpush1.xpose.msra.mxu0 0.0
    %68 = vmatprep.subr.mxu0 0.0
    %69 = vmatpush1.xpose.msra.mxu0 0.0
    %70 = vmatprep.subr.mxu0 0.0
    %71 = vmatpush1.xpose.msra.mxu0 0.0
    %72 = vmatprep.subr.mxu0 0.0
    %73 = vmatpush1.xpose.msra.mxu0 0.0
    %74 = vmatprep.subr.mxu0 0.0
    %75 = vmatpush1.xpose.msra.mxu0 0.0
    %76 = vmatprep.subr.mxu0 0.0
    %77 = vmatpush1.xpose.msra.mxu0 0.0
    %78 = vmatprep.subr.mxu0 0.0
    %79 = vmatpush1.xpose.msra.mxu0 %v46
    %80 = vmatprep.subr.mxu0 0.0
    %81 = vmatpush2.xpose.msra.mxu0 0.0
    %82 = vmatprep.subr.mxu0 0.0
    %83 = vmatpush2.xpose.msra.mxu0 0.0
    %84 = vmatprep.subr.mxu0 0.0
    %85 = vmatpush2.xpose.msra.mxu0 0.0
    %86 = vmatprep.subr.mxu0 0.0
    %87 = vmatpush2.xpose.msra.mxu0 0.0
    %88 = vmatprep.subr.mxu0 0.0
    %89 = vmatpush2.xpose.msra.mxu0 0.0
    %90 = vmatprep.subr.mxu0 0.0
    %91 = vmatpush2.xpose.msra.mxu0 0.0
    %92 = vmatprep.subr.mxu0 0.0
    %93 = vmatpush2.xpose.msra.mxu0 0.0
    %94 = vmatprep.subr.mxu0 0.0
    %95 = vmatpush2.xpose.msra.mxu0 0.0
    %96 = vmatprep.subr.mxu0 0.0
    %97 = vmatpush2.xpose.msra.mxu0 0.0
    %98 = vmatprep.subr.mxu0 0.0
    %99 = vmatpush2.xpose.msra.mxu0 0.0
    %100 = vmatprep.subr.mxu0 0.0
    %101 = vmatpush2.xpose.msra.mxu0 0.0
    %102 = vmatprep.subr.mxu0 0.0
    %103 = vmatpush2.xpose.msra.mxu0 0.0
    %104 = vmatprep.subr.mxu0 0.0
    %105 = vmatpush2.xpose.msra.mxu0 0.0
    %106 = vmatprep.subr.mxu0 0.0
    %107 = vmatpush2.xpose.msra.mxu0 0.0
    %108 = vmatprep.subr.mxu0 0.0
    %109 = vmatpush2.xpose.msra.mxu0 0.0
    %110 = vmatprep.subr.mxu0 0.0
    %111 = vmatpush2.xpose.msra.mxu0 0.0
    %112 = vmatprep.mubr.f32.mxu0 0.0
    %113 = vmatmul.mubr.f32.gmra.mxu0 %v43
    %v114 = vpop.f32.mrf.mxu0
    %v115 = vadd.f32 0.0, %v114
    %v116 = vpop.f32.mrf.mxu0
    %117 = vdwg.mxu0
    %v118 = vsub.f32 0.0, %v115
    %v119 = vmul.f32 %v118, 1.442695
    %v120 = vpow.pop %v119
    %v121 = vadd.f32 %v120, 1.0
    %v122 = vrcp.pop %v121
    %vm123 = vcmask 57344
    %124 = vst.msk [vmem:[#allocation7] sm:$0x1] %vm123, %v122
    // Predicated region
    $region18: #{tpu_custom_call.1} parent=1 // pred_check
      _
    $region19: #{tpu_custom_call.1} parent=1 // pred_check_branch
      %126 = sbr.rel (0) target = $region21
    $region20: #{tpu_custom_call.1} parent=1 // pred_region
      %s128 = ssub.s32 16, 16
      %129 = vsyncadd [#allocation4], %s128
      %s131 = sshll.u32 [#allocation7], 4
      %s132 = int_to_ptr.vmem [resolvable:$true] %s131
      %134 = dma.vmem_to_hbm [thread:$0]  %s132, 16, %s2, [#allocation4]
    $region21: #{tpu_custom_call.1} parent=1 // pred_fallthru
      _
    // Predicated region
    $region22: #{tpu_custom_call.1} parent=1 // pred_check
      _
    $region23: #{tpu_custom_call.1} parent=1 // pred_check_branch
      %136 = sbr.rel (0) target = $region25
    $region24: #{tpu_custom_call.1} parent=1 // pred_region
      %137 = dma.done [#allocation4], 16
    $region25: #{tpu_custom_call.1} parent=1 // pred_fallthru
      _
    %138 = vsyncpa [#allocation3], 1
    %139 = vsyncpa [#allocation6], 1
    %140 = vsyncpa [#allocation4], 1

</llo_original>
